<compile_context>
chip_gen: v7x
topology: tpu7x:2x2x1
jax: 0.10.0
libtpu: 0.0.40
codegen_flags: <defaults>
</compile_context>

<pallas_src>
import functools

import jax
import jax.numpy as jnp
from jax.experimental import pallas as pl
from jax.experimental.pallas import tpu as pltpu

LANE = 128


def _rup(n, m):
    return ((n + m - 1) // m) * m


# ---------------------------------------------------------------------------
# Kernel: one (tm, .) batch tile — layernorm + fc1/relu + fc2/relu + fc3 + reg
# ---------------------------------------------------------------------------
def _actor_kernel(x_ref, w1_ref, w2_ref, w3_ref, aux_ref, act_ref, reg_ref, *,
                  obs, obs_p, h1_p, h2_p, act_p, tm, b_true):
    pid = pl.program_id(0)

    # ---- LayerNorm over the true `obs` columns (padded lanes are zero) ----
    x = x_ref[...]                                              # (tm, obs_p) f32
    lane = jax.lax.broadcasted_iota(jnp.int32, (tm, obs_p), 1)
    lane_valid = lane < obs

    inv_obs = jnp.float32(1.0 / obs)
    mean = jnp.sum(x, axis=-1, keepdims=True) * inv_obs         # pads are 0
    centered = jnp.where(lane_valid, x - mean, 0.0)
    var = jnp.sum(centered * centered, axis=-1, keepdims=True) * inv_obs
    xn = centered * jax.lax.rsqrt(var + 1e-5)

    gamma = aux_ref[3:4, 0:obs_p]                               # (1, obs_p)
    beta = aux_ref[4:5, 0:obs_p]
    xn = xn * gamma + beta                                      # pads stay 0

    # ---- MLP: each weight exactly lane-padded, VMEM-resident ----
    b1 = aux_ref[0:1, 0:h1_p]
    b2 = aux_ref[1:2, 0:h2_p]
    b3 = aux_ref[2:3, 0:act_p]

    h1 = jnp.maximum(
        jnp.dot(xn, w1_ref[...], preferred_element_type=jnp.float32) + b1, 0.0)
    h2 = jnp.maximum(
        jnp.dot(h1, w2_ref[...], preferred_element_type=jnp.float32) + b2, 0.0)
    out = jnp.dot(h2, w3_ref[...], preferred_element_type=jnp.float32) + b3

    act_ref[...] = out.astype(act_ref.dtype)                    # lane-dense store

    # ---- regularizer partial sum (mask padded batch rows; pad cols are 0) --
    rows = pid * tm + jax.lax.broadcasted_iota(jnp.int32, (tm, 1), 0)
    row_valid = rows < b_true
    psum = jnp.sum(jnp.where(row_valid, out * out, 0.0))
    reg_ref[...] = jnp.broadcast_to(psum, reg_ref.shape)


# ---------------------------------------------------------------------------
# Host-side one-time packing: lane-pad weights + coalesce biases/LN into aux
# ---------------------------------------------------------------------------
def pack_params(p):
    obs, h1 = p["w1"].shape
    h2 = p["w2"].shape[1]
    act = p["w3"].shape[1]
    obs_p, h1_p, h2_p, act_p = (_rup(d, LANE) for d in (obs, h1, h2, act))
    auxw = max(obs_p, h1_p, h2_p, act_p)

    def pad2(w, rows, cols):
        return jnp.zeros((rows, cols), jnp.float32).at[
            :w.shape[0], :w.shape[1]].set(w.astype(jnp.float32))

    w1p = pad2(p["w1"], obs_p, h1_p)
    w2p = pad2(p["w2"], h1_p, h2_p)
    w3p = pad2(p["w3"], h2_p, act_p)

    aux = jnp.zeros((8, auxw), jnp.float32)
    aux = aux.at[0, :h1].set(p["b1"].reshape(-1))
    aux = aux.at[1, :h2].set(p["b2"].reshape(-1))
    aux = aux.at[2, :act].set(p["b3"].reshape(-1))
    aux = aux.at[3, :obs].set(p["gamma"].reshape(-1))
    aux = aux.at[4, :obs].set(p["beta"].reshape(-1))

    dims = dict(obs=obs, h1=h1, h2=h2, act=act,
                obs_p=obs_p, h1_p=h1_p, h2_p=h2_p, act_p=act_p, auxw=auxw)
    return (w1p, w2p, w3p, aux, dims)


# ---------------------------------------------------------------------------
# Wrapper factory: jitted batch-tiled pallas_call closed over packed params
# ---------------------------------------------------------------------------
def make_actor_forward(packed, *, tm=1024):
    """Returns fwd(x) -> (actions (B, act), regularizer scalar)."""
    w1p, w2p, w3p, aux, d = packed
    obs, act = d["obs"], d["act"]
    obs_p, h1_p, h2_p, act_p, auxw = (d["obs_p"], d["h1_p"], d["h2_p"],
                                      d["act_p"], d["auxw"])

    @jax.jit
    def fwd(x):
        B = x.shape[0]
        assert x.shape[1] == obs
        tile_m = min(_rup(max(tm, 8), 8), _rup(B, 8))
        b_pad = _rup(B, tile_m)
        num_tiles = b_pad // tile_m

        x_pad = jnp.zeros((b_pad, obs_p), jnp.float32).at[:B, :obs].set(
            x.astype(jnp.float32))

        kernel = functools.partial(
            _actor_kernel, obs=obs, obs_p=obs_p, h1_p=h1_p, h2_p=h2_p,
            act_p=act_p, tm=tile_m, b_true=B)

        acts_pad, reg_part = pl.pallas_call(
            kernel,
            out_shape=(
                jax.ShapeDtypeStruct((b_pad, act_p), jnp.float32),
                jax.ShapeDtypeStruct((num_tiles, 1, LANE), jnp.float32),
            ),
            grid_spec=pltpu.PrefetchScalarGridSpec(
                num_scalar_prefetch=0,
                grid=(num_tiles,),
                in_specs=[
                    pl.BlockSpec((tile_m, obs_p), lambda i: (i, 0)),  # streamed x
                    pl.BlockSpec((obs_p, h1_p), lambda i: (0, 0)),    # resident W1
                    pl.BlockSpec((h1_p, h2_p), lambda i: (0, 0)),     # resident W2
                    pl.BlockSpec((h2_p, act_p), lambda i: (0, 0)),    # resident W3
                    pl.BlockSpec((8, auxw), lambda i: (0, 0)),        # biases / LN
                ],
                out_specs=(
                    pl.BlockSpec((tile_m, act_p), lambda i: (i, 0)),  # streamed out
                    pl.BlockSpec((1, 1, LANE), lambda i: (i, 0, 0)),  # reg partials
                ),
            ),
            compiler_params=pltpu.CompilerParams(
                dimension_semantics=("parallel",),
                vmem_limit_bytes=32 * 1024 * 1024,
            ),
        )(x_pad, w1p, w2p, w3p, aux)

        actions = acts_pad[:B, :act]
        regularizer = jnp.sum(reg_part[:, 0, 0]) / jnp.float32(B * act)
        return actions, regularizer

    return fwd


# ---------------------------------------------------------------------------
# Deterministic synthetic init + pure-JAX reference
# ---------------------------------------------------------------------------
def init_params(key, obs_size, act_size, hid1, hid2):
    ks = jax.random.split(key, 8)

    def lin(kw, kb, fan_in, fan_out):
        bound = 1.0 / jnp.sqrt(jnp.float32(fan_in))
        w = jax.random.uniform(kw, (fan_in, fan_out), jnp.float32, -bound, bound)
        b = jax.random.uniform(kb, (1, fan_out), jnp.float32, -bound, bound)
        return w, b

    w1, b1 = lin(ks[0], ks[1], obs_size, hid1)
    w2, b2 = lin(ks[2], ks[3], hid1, hid2)
    w3, b3 = lin(ks[4], ks[5], hid2, act_size)
    # PyTorch LayerNorm inits gamma=1, beta=0; perturb slightly so the affine
    # path is actually exercised by the numerical check.
    gamma = 1.0 + 0.1 * jax.random.normal(ks[6], (1, obs_size), jnp.float32)
    beta = 0.1 * jax.random.normal(ks[7], (1, obs_size), jnp.float32)
    return {"gamma": gamma, "beta": beta,
            "w1": w1, "b1": b1, "w2": w2, "b2": b2, "w3": w3, "b3": b3}


def actor_reference(x, p):
    mean = jnp.mean(x, axis=-1, keepdims=True)
    var = jnp.mean((x - mean) ** 2, axis=-1, keepdims=True)
    xn = (x - mean) * jax.lax.rsqrt(var + 1e-5) * p["gamma"] + p["beta"]
    h1 = jnp.maximum(xn @ p["w1"] + p["b1"], 0.0)
    h2 = jnp.maximum(h1 @ p["w2"] + p["b2"], 0.0)
    out = h2 @ p["w3"] + p["b3"]
    return out, jnp.mean(out ** 2)


if __name__ == "__main__":
    # Actor(obs_size=32, act_size=8, hid1=64, hid2=32); B=300 exercises a
    # 3-tile grid (tm=128) with a partially-masked last tile.
    B, OBS, ACT, H1, H2 = 300, 32, 8, 64, 32

    key = jax.random.PRNGKey(0)
    k_x, k_p = jax.random.split(key)
    x = jax.random.normal(k_x, (B, OBS), jnp.float32)
    params = init_params(k_p, OBS, ACT, H1, H2)
    packed = pack_params(params)              # one-time host-side pad + pack

    actor_fwd = make_actor_forward(packed, tm=128)
    actions, reg = actor_fwd(x)
    jax.block_until_ready((actions, reg))

    ref_actions, ref_reg = actor_reference(x, params)
    assert actions.shape == (B, ACT)
    assert jnp.allclose(actions, ref_actions, atol=1e-4, rtol=1e-4), (
        float(jnp.max(jnp.abs(actions - ref_actions))))
    assert jnp.allclose(reg, ref_reg, atol=1e-5, rtol=1e-4), (
        float(reg), float(ref_reg))

    print("KERNEL_OK")
</pallas_src>

<mosaic_0001>
module attributes {stable_mosaic.version = 11 : i64} {
  func.func @_actor_kernel(%arg0: i32, %arg1: memref<128x128xf32, #tpu.memory_space<vmem>>, %arg2: memref<128x128xf32, #tpu.memory_space<vmem>>, %arg3: memref<128x128xf32, #tpu.memory_space<vmem>>, %arg4: memref<128x128xf32, #tpu.memory_space<vmem>>, %arg5: memref<8x128xf32, #tpu.memory_space<vmem>>, %arg6: memref<128x128xf32, #tpu.memory_space<vmem>>, %arg7: memref<1x1x128xf32, #tpu.memory_space<vmem>>) attributes {dimension_semantics = [#tpu.dimension_semantics<parallel>], iteration_bounds = array<i64: 3>, scalar_prefetch = 0 : i64, scratch_operands = 0 : i64, tpu.core_type = #tpu.core_type<tc>, window_params = [{transform_indices = @transform_0, window_bounds = array<i64: 128, 128>}, {pipeline_mode = #tpu.pipeline_mode<synchronous>, transform_indices = @transform_1, window_bounds = array<i64: 128, 128>}, {pipeline_mode = #tpu.pipeline_mode<synchronous>, transform_indices = @transform_2, window_bounds = array<i64: 128, 128>}, {pipeline_mode = #tpu.pipeline_mode<synchronous>, transform_indices = @transform_3, window_bounds = array<i64: 128, 128>}, {pipeline_mode = #tpu.pipeline_mode<synchronous>, transform_indices = @transform_4, window_bounds = array<i64: 8, 128>}, {transform_indices = @transform_5, window_bounds = array<i64: 128, 128>}, {transform_indices = @transform_6, window_bounds = array<i64: 1, 1, 128>}]} {
    %c0 = arith.constant 0 : index
    %c0_0 = arith.constant 0 : index
    %0 = vector.load %arg1[%c0, %c0_0] : memref<128x128xf32, #tpu.memory_space<vmem>>, vector<128x128xf32>
    %1 = tpu.iota {dimensions = array<i32: 1>} : vector<128x128xi32>
    %c32_i32 = arith.constant 32 : i32
    %2 = vector.broadcast %c32_i32 : i32 to vector<128x128xi32>
    %3 = arith.cmpi slt, %1, %2 : vector<128x128xi32>
    %cst = arith.constant dense<0.000000e+00> : vector<128xf32>
    %4 = vector.multi_reduction <add>, %0, %cst [1] : vector<128x128xf32> to vector<128xf32>
    %5 = vector.shape_cast %4 : vector<128xf32> to vector<128x1xf32>
    %cst_1 = arith.constant 3.125000e-02 : f32
    %6 = vector.broadcast %cst_1 : f32 to vector<128x1xf32>
    %7 = arith.mulf %5, %6 : vector<128x1xf32>
    %8 = vector.broadcast %7 : vector<128x1xf32> to vector<128x128xf32>
    %9 = arith.subf %0, %8 : vector<128x128xf32>
    %cst_2 = arith.constant 0.000000e+00 : f32
    %10 = vector.broadcast %cst_2 : f32 to vector<128x128xf32>
    %11 = arith.select %3, %9, %10 : vector<128x128xi1>, vector<128x128xf32>
    %12 = arith.mulf %11, %11 : vector<128x128xf32>
    %cst_3 = arith.constant dense<0.000000e+00> : vector<128xf32>
    %13 = vector.multi_reduction <add>, %12, %cst_3 [1] : vector<128x128xf32> to vector<128xf32>
    %14 = vector.shape_cast %13 : vector<128xf32> to vector<128x1xf32>
    %cst_4 = arith.constant 3.125000e-02 : f32
    %15 = vector.broadcast %cst_4 : f32 to vector<128x1xf32>
    %16 = arith.mulf %14, %15 : vector<128x1xf32>
    %cst_5 = arith.constant 9.99999974E-6 : f32
    %17 = vector.broadcast %cst_5 : f32 to vector<128x1xf32>
    %18 = arith.addf %16, %17 : vector<128x1xf32>
    %19 = math.rsqrt %18 : vector<128x1xf32>
    %20 = vector.broadcast %19 : vector<128x1xf32> to vector<128x128xf32>
    %21 = arith.mulf %11, %20 : vector<128x128xf32>
    %c3 = arith.constant 3 : index
    %c0_6 = arith.constant 0 : index
    %22 = vector.load %arg5[%c3, %c0_6] : memref<8x128xf32, #tpu.memory_space<vmem>>, vector<1x128xf32>
    %c4 = arith.constant 4 : index
    %c0_7 = arith.constant 0 : index
    %23 = vector.load %arg5[%c4, %c0_7] : memref<8x128xf32, #tpu.memory_space<vmem>>, vector<1x128xf32>
    %24 = vector.broadcast %22 : vector<1x128xf32> to vector<128x128xf32>
    %25 = arith.mulf %21, %24 : vector<128x128xf32>
    %26 = vector.broadcast %23 : vector<1x128xf32> to vector<128x128xf32>
    %27 = arith.addf %25, %26 : vector<128x128xf32>
    %c0_8 = arith.constant 0 : index
    %c0_9 = arith.constant 0 : index
    %28 = vector.load %arg5[%c0_8, %c0_9] : memref<8x128xf32, #tpu.memory_space<vmem>>, vector<1x128xf32>
    %c1 = arith.constant 1 : index
    %c0_10 = arith.constant 0 : index
    %29 = vector.load %arg5[%c1, %c0_10] : memref<8x128xf32, #tpu.memory_space<vmem>>, vector<1x128xf32>
    %c2 = arith.constant 2 : index
    %c0_11 = arith.constant 0 : index
    %30 = vector.load %arg5[%c2, %c0_11] : memref<8x128xf32, #tpu.memory_space<vmem>>, vector<1x128xf32>
    %c0_12 = arith.constant 0 : index
    %c0_13 = arith.constant 0 : index
    %31 = vector.load %arg2[%c0_12, %c0_13] : memref<128x128xf32, #tpu.memory_space<vmem>>, vector<128x128xf32>
    %cst_14 = arith.constant dense<0.000000e+00> : vector<128x128xf32>
    %32 = tpu.matmul %27, %31, %cst_14 {dimension_numbers = #tpu.dot_dimension_numbers<[1], [0], [0], [1], [0, 0, 1, 1], [], []>} : vector<128x128xf32>, vector<128x128xf32>, vector<128x128xf32> -> vector<128x128xf32>
    %33 = vector.broadcast %28 : vector<1x128xf32> to vector<128x128xf32>
    %34 = arith.addf %32, %33 : vector<128x128xf32>
    %cst_15 = arith.constant 0.000000e+00 : f32
    %35 = vector.broadcast %cst_15 : f32 to vector<128x128xf32>
    %36 = arith.maximumf %34, %35 : vector<128x128xf32>
    %c0_16 = arith.constant 0 : index
    %c0_17 = arith.constant 0 : index
    %37 = vector.load %arg3[%c0_16, %c0_17] : memref<128x128xf32, #tpu.memory_space<vmem>>, vector<128x128xf32>
    %cst_18 = arith.constant dense<0.000000e+00> : vector<128x128xf32>
    %38 = tpu.matmul %36, %37, %cst_18 {dimension_numbers = #tpu.dot_dimension_numbers<[1], [0], [0], [1], [0, 0, 1, 1], [], []>} : vector<128x128xf32>, vector<128x128xf32>, vector<128x128xf32> -> vector<128x128xf32>
    %39 = vector.broadcast %29 : vector<1x128xf32> to vector<128x128xf32>
    %40 = arith.addf %38, %39 : vector<128x128xf32>
    %cst_19 = arith.constant 0.000000e+00 : f32
    %41 = vector.broadcast %cst_19 : f32 to vector<128x128xf32>
    %42 = arith.maximumf %40, %41 : vector<128x128xf32>
    %c0_20 = arith.constant 0 : index
    %c0_21 = arith.constant 0 : index
    %43 = vector.load %arg4[%c0_20, %c0_21] : memref<128x128xf32, #tpu.memory_space<vmem>>, vector<128x128xf32>
    %cst_22 = arith.constant dense<0.000000e+00> : vector<128x128xf32>
    %44 = tpu.matmul %42, %43, %cst_22 {dimension_numbers = #tpu.dot_dimension_numbers<[1], [0], [0], [1], [0, 0, 1, 1], [], []>} : vector<128x128xf32>, vector<128x128xf32>, vector<128x128xf32> -> vector<128x128xf32>
    %45 = vector.broadcast %30 : vector<1x128xf32> to vector<128x128xf32>
    %46 = arith.addf %44, %45 : vector<128x128xf32>
    %c0_23 = arith.constant 0 : index
    %c0_24 = arith.constant 0 : index
    %47 = vector.load %arg6[%c0_23, %c0_24] : memref<128x128xf32, #tpu.memory_space<vmem>>, vector<128x128xf32>
    tpu.vector_store %arg6[%c0_23, %c0_24], %46 {strides = array<i32>} : memref<128x128xf32, #tpu.memory_space<vmem>>, vector<128x128xf32>,
    %c128_i32 = arith.constant 128 : i32
    %48 = arith.muli %arg0, %c128_i32 : i32
    %49 = tpu.iota {dimensions = array<i32: 0>} : vector<128x1xi32>
    %50 = vector.broadcast %48 : i32 to vector<128x1xi32>
    %51 = arith.addi %50, %49 : vector<128x1xi32>
    %c300_i32 = arith.constant 300 : i32
    %52 = vector.broadcast %c300_i32 : i32 to vector<128x1xi32>
    %53 = arith.cmpi slt, %51, %52 : vector<128x1xi32>
    %54 = arith.mulf %46, %46 : vector<128x128xf32>
    %cst_25 = arith.constant 0.000000e+00 : f32
    %55 = vector.shape_cast %53 : vector<128x1xi1> to vector<128x1xi1>
    %56 = vector.broadcast %55 : vector<128x1xi1> to vector<128x128xi1>
    %57 = vector.broadcast %cst_25 : f32 to vector<128x128xf32>
    %58 = arith.select %56, %54, %57 : vector<128x128xi1>, vector<128x128xf32>
    %59 = vector.shape_cast %58 : vector<128x128xf32> to vector<1x128x128xf32>
    %cst_26 = arith.constant dense<0.000000e+00> : vector<1xf32>
    %60 = vector.multi_reduction <add>, %59, %cst_26 [1, 2] : vector<1x128x128xf32> to vector<1xf32>
    %61 = vector.shape_cast %60 : vector<1xf32> to vector<1x1x1xf32>
    %62 = vector.extract %61[0, 0, 0] : f32 from vector<1x1x1xf32>
    %63 = vector.broadcast %62 : f32 to vector<1x1x128xf32>
    %c0_27 = arith.constant 0 : index
    %c0_28 = arith.constant 0 : index
    %c0_29 = arith.constant 0 : index
    %64 = vector.load %arg7[%c0_27, %c0_28, %c0_29] : memref<1x1x128xf32, #tpu.memory_space<vmem>>, vector<1x1x128xf32>
    tpu.vector_store %arg7[%c0_27, %c0_28, %c0_29], %63 {strides = array<i32>} : memref<1x1x128xf32, #tpu.memory_space<vmem>>, vector<1x1x128xf32>,
    return
  }
  func.func @transform_0(%arg0: i32) -> (i32, i32) {
    %c0_i32 = arith.constant 0 : i32
    %c0_i32_0 = arith.constant 0 : i32
    return %arg0, %c0_i32 : i32, i32
  }
  func.func @transform_1(%arg0: i32) -> (i32, i32) {
    %c0_i32 = arith.constant 0 : i32
    %c0_i32_0 = arith.constant 0 : i32
    %c0_i32_1 = arith.constant 0 : i32
    return %c0_i32, %c0_i32_0 : i32, i32
  }
  func.func @transform_2(%arg0: i32) -> (i32, i32) {
    %c0_i32 = arith.constant 0 : i32
    %c0_i32_0 = arith.constant 0 : i32
    %c0_i32_1 = arith.constant 0 : i32
    return %c0_i32, %c0_i32_0 : i32, i32
  }
  func.func @transform_3(%arg0: i32) -> (i32, i32) {
    %c0_i32 = arith.constant 0 : i32
    %c0_i32_0 = arith.constant 0 : i32
    %c0_i32_1 = arith.constant 0 : i32
    return %c0_i32, %c0_i32_0 : i32, i32
  }
  func.func @transform_4(%arg0: i32) -> (i32, i32) {
    %c0_i32 = arith.constant 0 : i32
    %c0_i32_0 = arith.constant 0 : i32
    %c0_i32_1 = arith.constant 0 : i32
    return %c0_i32, %c0_i32_0 : i32, i32
  }
  func.func @transform_5(%arg0: i32) -> (i32, i32) {
    %c0_i32 = arith.constant 0 : i32
    %c0_i32_0 = arith.constant 0 : i32
    return %arg0, %c0_i32 : i32, i32
  }
  func.func @transform_6(%arg0: i32) -> (i32, i32, i32) {
    %c0_i32 = arith.constant 0 : i32
    %c0_i32_0 = arith.constant 0 : i32
    %c0_i32_1 = arith.constant 0 : i32
    return %arg0, %c0_i32, %c0_i32_0 : i32, i32, i32
  }
}

</mosaic_0001>

<llo_original>
// kernel: fwd.1
$region0: #{fwd.1}
  #allocation0 [shape = 'u32[]', space=smem, size = 0x4, offset = 0x4, fixed_abs, tag = 'smem constant byte address 0x4 - core index']
  #allocation1 [shape = 'u32[144,128]{1,0:T(1,128)}', space=vmem, size = 0x12000, scoped, tag = 'internal scratch']
  %s0 = inlined_call_operand.vmem [shape: f32[384,128], index: 0, kind: input, shape index: {}]
  %s1 = inlined_call_operand.vmem [shape: f32[128,128], index: 1, kind: input, shape index: {}]
  %s2 = inlined_call_operand.vmem [shape: f32[128,128], index: 2, kind: input, shape index: {}]
  %s3 = inlined_call_operand.vmem [shape: f32[128,128], index: 3, kind: input, shape index: {}]
  %s4 = inlined_call_operand.vmem [shape: f32[8,128], index: 4, kind: input, shape index: {}]
  %s5 = inlined_call_operand.vmem [shape: f32[384,128], index: 5, kind: output, shape index: {0}]
  %s6 = inlined_call_operand.vmem [shape: f32[3,1,128], index: 6, kind: output, shape index: {1}]
  %7 = xla_tuple %s5, %s6
  %s8 = sld [smem:[#allocation0]]
  $region61: #{fwd.1} parent=0
    _
  %s10 = ssub.s32 1, %s8
  %s11 = scalar_select 0, %s10, %s8
  loop: start=0, step=1, limit=5
  $region2: #{fwd.1} parent=0 // loop_pre_header
    _
  $region3: #{fwd.1} parent=0 // loop_header
    %s13 = sphi 0, %s17
    %p14 = scmp.ge.s32.totalorder %s13, 5
    %s23 = sphi 0, %s25
    %s26 = sphi 0, %s23
    %s27 = sphi 0, %s26
    %s43 = sphi 0, %s27
    %s47 = sphi 0, %s47
    %s49 = sphi 0, %s47
    %s50 = sphi 0, %s49
    %s64 = sphi 0, %s50
    %s68 = sphi 0, %s68
    %s70 = sphi 0, %s68
    %s71 = sphi 0, %s70
    %s85 = sphi 0, %s71
    %s89 = sphi 0, %s89
    %s91 = sphi 0, %s89
    %s92 = sphi 0, %s91
    %s106 = sphi 0, %s92
    %s110 = sphi 0, %s110
    %s112 = sphi 0, %s110
    %s113 = sphi 0, %s112
    %s127 = sphi 0, %s113
    %s133 = sphi 0, %s135
    %s136 = sphi 0, %s133
    %s137 = sphi 0, %s136
    %s153 = sphi 0, %s137
    %s159 = sphi 0, %s161
    %s162 = sphi 0, %s159
    %s163 = sphi 0, %s162
    %s179 = sphi 0, %s163
  $region4: #{fwd.1} parent=0 // loop_header_branch
    %16 = sbr.rel (%p14) target = $region8
  $region5: #{fwd.1} parent=0 // loop_body
    %s18 = ssub.s32 %s13, 1
    %s19 = ssub.s32 %s13, 2
    %s20 = sadd.s32 %s13, 1
    %s21 = ssub.s32 %s13, %s20
    %p22 = scmp.eq.s32.totalorder %s21, 0
    %s24 = sadd.s32 %s23, 1
    %s25 = scalar_select %p22, %s23, %s24
    %p28 = pneg %p22
    %p29 = scmp.eq.s32.totalorder %s13, 2
    %p30 = por %p28, %p29
    %p31 = scmp.ne.s32.totalorder %s23, %s26
    %p32 = scmp.eq.s32.totalorder %s13, 0
    %p33 = por %p31, %p32
    %p34 = scmp.ne.s32.totalorder %s23, %s26
    %p35 = scmp.eq.s32.totalorder %s18, 2
    %p36 = por %p34, %p35
    %p37 = scmp.ne.s32.totalorder %s26, %s27
    %p38 = scmp.eq.s32.totalorder %s18, 0
    %p39 = por %p37, %p38
    %p40 = scmp.ne.s32.totalorder %s26, %s27
    %p41 = scmp.eq.s32.totalorder %s19, 2
    %p42 = por %p40, %p41
    %p44 = scmp.ne.s32.totalorder %s27, %s43
    %p45 = scmp.eq.s32.totalorder %s19, 0
    %p46 = por %p44, %p45
    %s48 = sadd.s32 %s47, 1
    %p51 = scmp.eq.s32.totalorder %s13, 2
    %p52 = scmp.ne.s32.totalorder %s47, %s49
    %p53 = scmp.eq.s32.totalorder %s13, 0
    %p54 = por %p52, %p53
    %p55 = scmp.ne.s32.totalorder %s47, %s49
    %p56 = scmp.eq.s32.totalorder %s18, 2
    %p57 = por %p55, %p56
    %p58 = scmp.ne.s32.totalorder %s49, %s50
    %p59 = scmp.eq.s32.totalorder %s18, 0
    %p60 = por %p58, %p59
    %p61 = scmp.ne.s32.totalorder %s49, %s50
    %p62 = scmp.eq.s32.totalorder %s19, 2
    %p63 = por %p61, %p62
    %p65 = scmp.ne.s32.totalorder %s50, %s64
    %p66 = scmp.eq.s32.totalorder %s19, 0
    %p67 = por %p65, %p66
    %s69 = sadd.s32 %s68, 1
    %p72 = scmp.eq.s32.totalorder %s13, 2
    %p73 = scmp.ne.s32.totalorder %s68, %s70
    %p74 = scmp.eq.s32.totalorder %s13, 0
    %p75 = por %p73, %p74
    %p76 = scmp.ne.s32.totalorder %s68, %s70
    %p77 = scmp.eq.s32.totalorder %s18, 2
    %p78 = por %p76, %p77
    %p79 = scmp.ne.s32.totalorder %s70, %s71
    %p80 = scmp.eq.s32.totalorder %s18, 0
    %p81 = por %p79, %p80
    %p82 = scmp.ne.s32.totalorder %s70, %s71
    %p83 = scmp.eq.s32.totalorder %s19, 2
    %p84 = por %p82, %p83
    %p86 = scmp.ne.s32.totalorder %s71, %s85
    %p87 = scmp.eq.s32.totalorder %s19, 0
    %p88 = por %p86, %p87
    %s90 = sadd.s32 %s89, 1
    %p93 = scmp.eq.s32.totalorder %s13, 2
    %p94 = scmp.ne.s32.totalorder %s89, %s91
    %p95 = scmp.eq.s32.totalorder %s13, 0
    %p96 = por %p94, %p95
    %p97 = scmp.ne.s32.totalorder %s89, %s91
    %p98 = scmp.eq.s32.totalorder %s18, 2
    %p99 = por %p97, %p98
    %p100 = scmp.ne.s32.totalorder %s91, %s92
    %p101 = scmp.eq.s32.totalorder %s18, 0
    %p102 = por %p100, %p101
    %p103 = scmp.ne.s32.totalorder %s91, %s92
    %p104 = scmp.eq.s32.totalorder %s19, 2
    %p105 = por %p103, %p104
    %p107 = scmp.ne.s32.totalorder %s92, %s106
    %p108 = scmp.eq.s32.totalorder %s19, 0
    %p109 = por %p107, %p108
    %s111 = sadd.s32 %s110, 1
    %p114 = scmp.eq.s32.totalorder %s13, 2
    %p115 = scmp.ne.s32.totalorder %s110, %s112
    %p116 = scmp.eq.s32.totalorder %s13, 0
    %p117 = por %p115, %p116
    %p118 = scmp.ne.s32.totalorder %s110, %s112
    %p119 = scmp.eq.s32.totalorder %s18, 2
    %p120 = por %p118, %p119
    %p121 = scmp.ne.s32.totalorder %s112, %s113
    %p122 = scmp.eq.s32.totalorder %s18, 0
    %p123 = por %p121, %p122
    %p124 = scmp.ne.s32.totalorder %s112, %s113
    %p125 = scmp.eq.s32.totalorder %s19, 2
    %p126 = por %p124, %p125
    %p128 = scmp.ne.s32.totalorder %s113, %s127
    %p129 = scmp.eq.s32.totalorder %s19, 0
    %p130 = por %p128, %p129
    %s131 = ssub.s32 %s13, %s20
    %p132 = scmp.eq.s32.totalorder %s131, 0
    %s134 = sadd.s32 %s133, 1
    %s135 = scalar_select %p132, %s133, %s134
    %p138 = pneg %p132
    %p139 = scmp.eq.s32.totalorder %s13, 2
    %p140 = por %p138, %p139
    %p141 = scmp.ne.s32.totalorder %s133, %s136
    %p142 = scmp.eq.s32.totalorder %s13, 0
    %p143 = por %p141, %p142
    %p144 = scmp.ne.s32.totalorder %s133, %s136
    %p145 = scmp.eq.s32.totalorder %s18, 2
    %p146 = por %p144, %p145
    %p147 = scmp.ne.s32.totalorder %s136, %s137
    %p148 = scmp.eq.s32.totalorder %s18, 0
    %p149 = por %p147, %p148
    %p150 = scmp.ne.s32.totalorder %s136, %s137
    %p151 = scmp.eq.s32.totalorder %s19, 2
    %p152 = por %p150, %p151
    %p154 = scmp.ne.s32.totalorder %s137, %s153
    %p155 = scmp.eq.s32.totalorder %s19, 0
    %p156 = por %p154, %p155
    %s157 = ssub.s32 %s13, %s20
    %p158 = scmp.eq.s32.totalorder %s157, 0
    %s160 = sadd.s32 %s159, 1
    %s161 = scalar_select %p158, %s159, %s160
    %p164 = pneg %p158
    %p165 = scmp.eq.s32.totalorder %s13, 2
    %p166 = por %p164, %p165
    %p167 = scmp.ne.s32.totalorder %s159, %s162
    %p168 = scmp.eq.s32.totalorder %s13, 0
    %p169 = por %p167, %p168
    %p170 = scmp.ne.s32.totalorder %s159, %s162
    %p171 = scmp.eq.s32.totalorder %s18, 2
    %p172 = por %p170, %p171
    %p173 = scmp.ne.s32.totalorder %s162, %s163
    %p174 = scmp.eq.s32.totalorder %s18, 0
    %p175 = por %p173, %p174
    %p176 = scmp.ne.s32.totalorder %s162, %s163
    %p177 = scmp.eq.s32.totalorder %s19, 2
    %p178 = por %p176, %p177
    %p180 = scmp.ne.s32.totalorder %s163, %s179
    %p181 = scmp.eq.s32.totalorder %s19, 0
    %p182 = por %p180, %p181
    %p183 = scmp.le.s32.totalorder 1, %s13
    %p184 = scmp.lt.s32.totalorder %s13, 4
    %p185 = pnand %p183, %p184
    %p186 = pneg %p185
    // Predicated region
    $region9: #{fwd.1} parent=5 // pred_check
      _
    $region10: #{fwd.1} parent=5 // pred_check_branch
      %188 = sbr.rel (%p185) target = $region12
    $region11: #{fwd.1} parent=5 // pred_region
      %s189 = ssub.s32 %s13, 1
      // Predicated region
      $region13: #{fwd.1} parent=11 // pred_check
        %p190 = pneg %p60
      $region14: #{fwd.1} parent=11 // pred_check_branch
        %192 = sbr.rel (%p190) target = $region16
      $region15: #{fwd.1} parent=11 // pred_region
        _
      $region16: #{fwd.1} parent=11 // pred_fallthru
        _
      // Predicated region
      $region17: #{fwd.1} parent=11 // pred_check
        %p193 = pneg %p81
      $region18: #{fwd.1} parent=11 // pred_check_branch
        %195 = sbr.rel (%p193) target = $region20
      $region19: #{fwd.1} parent=11 // pred_region
        _
      $region20: #{fwd.1} parent=11 // pred_fallthru
        _
      // Predicated region
      $region21: #{fwd.1} parent=11 // pred_check
        %p196 = pneg %p102
      $region22: #{fwd.1} parent=11 // pred_check_branch
        %198 = sbr.rel (%p196) target = $region24
      $region23: #{fwd.1} parent=11 // pred_region
        _
      $region24: #{fwd.1} parent=11 // pred_fallthru
        _
      // Predicated region
      $region25: #{fwd.1} parent=11 // pred_check
        %p199 = pneg %p123
      $region26: #{fwd.1} parent=11 // pred_check_branch
        %201 = sbr.rel (%p199) target = $region28
      $region27: #{fwd.1} parent=11 // pred_region
        _
      $region28: #{fwd.1} parent=11 // pred_fallthru
        _
    $region12: #{fwd.1} parent=5 // pred_fallthru
      _
    %p202 = scmp.lt.s32.totalorder %s13, 3
    // Predicated region
    $region29: #{fwd.1} parent=5 // pred_check
      %p203 = pneg %p202
    $region30: #{fwd.1} parent=5 // pred_check_branch
      %205 = sbr.rel (%p203) target = $region32
    $region31: #{fwd.1} parent=5 // pred_region
      // Predicated region
      $region33: #{fwd.1} parent=31 // pred_check
        %p206 = pneg %p33
      $region34: #{fwd.1} parent=31 // pred_check_branch
        %208 = sbr.rel (%p206) target = $region36
      $region35: #{fwd.1} parent=31 // pred_region
        %s209 = smul.u32 16, %s13
        %p210 = scmp.lt.s32.totalorder %s209, 47
        %s211 = scalar_select %p210, %s209, 47
        %s212 = smul.addr %s211, 8
        %s213 = scalar_lea.vmem %s0, %s212
        %s214 = smul.u32 16, %s13
      $region36: #{fwd.1} parent=31 // pred_fallthru
        _
    $region32: #{fwd.1} parent=5 // pred_fallthru
      _
    %p215 = scmp.le.s32.totalorder 1, %s13
    %p216 = scmp.lt.s32.totalorder %s13, 4
    %p217 = pnand %p215, %p216
    %p218 = pneg %p217
    // Predicated region
    $region37: #{fwd.1} parent=5 // pred_check
      _
    $region38: #{fwd.1} parent=5 // pred_check_branch
      %220 = sbr.rel (%p217) target = $region40
    $region39: #{fwd.1} parent=5 // pred_region
      %s221 = ssub.s32 %s13, 1
      %s222 = smul.u32 16, %s18
      %p223 = scmp.lt.s32.totalorder %s222, 47
      %s224 = scalar_select %p223, %s222, 47
      %s225 = smul.addr %s224, 8
      %s226 = scalar_lea.vmem %s0, %s225
      %p227 = pneg %p39
      %p228 = pneg %p36
      %p229 = pneg %p60
      %p230 = pneg %p57
      %p231 = pneg %p81
      %p232 = pneg %p78
      %p233 = pneg %p102
      %p234 = pneg %p99
      %p235 = pneg %p123
      %p236 = pneg %p120
      %p237 = pneg %p149
      %p238 = pneg %p146
      %s239 = smul.u32 16, %s18
      %p240 = scmp.lt.s32.totalorder %s239, 47
      %s241 = scalar_select %p240, %s239, 47
      %s242 = smul.addr %s241, 8
      %s243 = scalar_lea.vmem %s5, %s242
      %p244 = pneg %p175
      %p245 = pneg %p172
      %p246 = scmp.lt.s32.totalorder %s18, 2
      %s247 = scalar_select %p246, %s18, 2
      %s248 = scalar_lea.vmem %s6, %s247
      %s249 = smul.u32 16, %s18
      %p250 = scmp.lt.s32.totalorder %s249, 47
      %s251 = scalar_select %p250, %s249, 47
      %s252 = smul.addr %s251, 8
      %s253 = scalar_lea.vmem %s0, %s252
      %s254 = smul.u32 16, %s18
      %s255 = smul.u32 16, %s18
      %p256 = scmp.lt.s32.totalorder %s255, 47
      %s257 = scalar_select %p256, %s255, 47
      %s258 = smul.addr %s257, 8
      %s259 = scalar_lea.vmem %s5, %s258
      %s260 = smul.u32 16, %s18
      %p261 = scmp.lt.s32.totalorder %s18, 2
      %s262 = scalar_select %p261, %s18, 2
      %s263 = scalar_lea.vmem %s6, %s262
      %v264 = vld [vmem:[%s253] sm:$0xff]
      %v265 = vld [vmem:[%s253 + $0x8] sm:$0xff]
      %v266 = vld [vmem:[%s253 + $0x10] sm:$0xff]
      %v267 = vld [vmem:[%s253 + $0x18] sm:$0xff]
      %v268 = vld [vmem:[%s253 + $0x20] sm:$0xff]
      %v269 = vld [vmem:[%s253 + $0x28] sm:$0xff]
      %v270 = vld [vmem:[%s253 + $0x30] sm:$0xff]
      %v271 = vld [vmem:[%s253 + $0x38] sm:$0xff]
      %v272 = vld [vmem:[%s253 + $0x40] sm:$0xff]
      %v273 = vld [vmem:[%s253 + $0x48] sm:$0xff]
      %v274 = vld [vmem:[%s253 + $0x50] sm:$0xff]
      %v275 = vld [vmem:[%s253 + $0x58] sm:$0xff]
      %v276 = vld [vmem:[%s253 + $0x60] sm:$0xff]
      %v277 = vld [vmem:[%s253 + $0x68] sm:$0xff]
      %v278 = vld [vmem:[%s253 + $0x70] sm:$0xff]
      %v279 = vld [vmem:[%s253 + $0x78] sm:$0xff]
      %v280 = vlaneseq
      %v281 = vand.u32 %v280, 127
      %vm282 = vcmp.lt.s32.totalorder %v281, 32
      %283 = vadd.xlane.f32.xlu0 %v264
      %v284 = vpop.xlane.xlu0 %283
      %285 = vadd.xlane.f32.xlu0 %v265
      %v286 = vpop.xlane.xlu0 %285
      %287 = vadd.xlane.f32.xlu0 %v266
      %v288 = vpop.xlane.xlu0 %287
      %289 = vadd.xlane.f32.xlu0 %v267
      %v290 = vpop.xlane.xlu0 %289
      %291 = vadd.xlane.f32.xlu0 %v268
      %v292 = vpop.xlane.xlu0 %291
      %293 = vadd.xlane.f32.xlu0 %v269
      %v294 = vpop.xlane.xlu0 %293
      %295 = vadd.xlane.f32.xlu0 %v270
      %v296 = vpop.xlane.xlu0 %295
      %297 = vadd.xlane.f32.xlu0 %v271
      %v298 = vpop.xlane.xlu0 %297
      %299 = vadd.xlane.f32.xlu0 %v272
      %v300 = vpop.xlane.xlu0 %299
      %301 = vadd.xlane.f32.xlu0 %v273
      %v302 = vpop.xlane.xlu0 %301
      %303 = vadd.xlane.f32.xlu0 %v274
      %v304 = vpop.xlane.xlu0 %303
      %305 = vadd.xlane.f32.xlu0 %v275
      %v306 = vpop.xlane.xlu0 %305
      %307 = vadd.xlane.f32.xlu0 %v276
      %v308 = vpop.xlane.xlu0 %307
      %309 = vadd.xlane.f32.xlu0 %v277
      %v310 = vpop.xlane.xlu0 %309
      %311 = vadd.xlane.f32.xlu0 %v278
      %v312 = vpop.xlane.xlu0 %311
      %313 = vadd.xlane.f32.xlu0 %v279
      %v314 = vpop.xlane.xlu0 %313
      %v315 = vmul.f32 %v284, 0.03125
      %v316 = vmul.f32 %v286, 0.03125
      %v317 = vmul.f32 %v288, 0.03125
      %v318 = vmul.f32 %v290, 0.03125
      %v319 = vmul.f32 %v292, 0.03125
      %v320 = vmul.f32 %v294, 0.03125
      %v321 = vmul.f32 %v296, 0.03125
      %v322 = vmul.f32 %v298, 0.03125
      %v323 = vmul.f32 %v300, 0.03125
      %v324 = vmul.f32 %v302, 0.03125
      %v325 = vmul.f32 %v304, 0.03125
      %v326 = vmul.f32 %v306, 0.03125
      %v327 = vmul.f32 %v308, 0.03125
      %v328 = vmul.f32 %v310, 0.03125
      %v329 = vmul.f32 %v312, 0.03125
      %v330 = vmul.f32 %v314, 0.03125
      %v331 = vsub.f32 %v264, %v315
      %v332 = vsub.f32 %v265, %v316
      %v333 = vsub.f32 %v266, %v317
      %v334 = vsub.f32 %v267, %v318
      %v335 = vsub.f32 %v268, %v319
      %v336 = vsub.f32 %v269, %v320
      %v337 = vsub.f32 %v270, %v321
      %v338 = vsub.f32 %v271, %v322
      %v339 = vsub.f32 %v272, %v323
      %v340 = vsub.f32 %v273, %v324
      %v341 = vsub.f32 %v274, %v325
      %v342 = vsub.f32 %v275, %v326
      %v343 = vsub.f32 %v276, %v327
      %v344 = vsub.f32 %v277, %v328
      %v345 = vsub.f32 %v278, %v329
      %v346 = vsub.f32 %v279, %v330
      %v347 = vsel %vm282, %v331, 0.0
      %v348 = vsel %vm282, %v332, 0.0
      %v349 = vsel %vm282, %v333, 0.0
      %v350 = vsel %vm282, %v334, 0.0
      %v351 = vsel %vm282, %v335, 0.0
      %v352 = vsel %vm282, %v336, 0.0
      %v353 = vsel %vm282, %v337, 0.0
      %v354 = vsel %vm282, %v338, 0.0
      %v355 = vsel %vm282, %v339, 0.0
      %v356 = vsel %vm282, %v340, 0.0
      %v357 = vsel %vm282, %v341, 0.0
      %v358 = vsel %vm282, %v342, 0.0
      %v359 = vsel %vm282, %v343, 0.0
      %v360 = vsel %vm282, %v344, 0.0
      %v361 = vsel %vm282, %v345, 0.0
      %v362 = vsel %vm282, %v346, 0.0
      %v363 = vmul.f32 %v347, %v347
      %v364 = vmul.f32 %v348, %v348
      %v365 = vmul.f32 %v349, %v349
      %v366 = vmul.f32 %v350, %v350
      %v367 = vmul.f32 %v351, %v351
      %v368 = vmul.f32 %v352, %v352
      %v369 = vmul.f32 %v353, %v353
      %v370 = vmul.f32 %v354, %v354
      %v371 = vmul.f32 %v355, %v355
      %v372 = vmul.f32 %v356, %v356
      %v373 = vmul.f32 %v357, %v357
      %v374 = vmul.f32 %v358, %v358
      %v375 = vmul.f32 %v359, %v359
      %v376 = vmul.f32 %v360, %v360
      %v377 = vmul.f32 %v361, %v361
      %v378 = vmul.f32 %v362, %v362
      %379 = vadd.xlane.f32.xlu0 %v363
      %v380 = vpop.xlane.xlu0 %379
      %381 = vadd.xlane.f32.xlu0 %v364
      %v382 = vpop.xlane.xlu0 %381
      %383 = vadd.xlane.f32.xlu0 %v365
      %v384 = vpop.xlane.xlu0 %383
      %385 = vadd.xlane.f32.xlu0 %v366
      %v386 = vpop.xlane.xlu0 %385
      %387 = vadd.xlane.f32.xlu0 %v367
      %v388 = vpop.xlane.xlu0 %387
      %389 = vadd.xlane.f32.xlu0 %v368
      %v390 = vpop.xlane.xlu0 %389
      %391 = vadd.xlane.f32.xlu0 %v369
      %v392 = vpop.xlane.xlu0 %391
      %393 = vadd.xlane.f32.xlu0 %v370
      %v394 = vpop.xlane.xlu0 %393
      %395 = vadd.xlane.f32.xlu0 %v371
      %v396 = vpop.xlane.xlu0 %395
      %397 = vadd.xlane.f32.xlu0 %v372
      %v398 = vpop.xlane.xlu0 %397
      %399 = vadd.xlane.f32.xlu0 %v373
      %v400 = vpop.xlane.xlu0 %399
      %401 = vadd.xlane.f32.xlu0 %v374
      %v402 = vpop.xlane.xlu0 %401
      %403 = vadd.xlane.f32.xlu0 %v375
      %v404 = vpop.xlane.xlu0 %403
      %405 = vadd.xlane.f32.xlu0 %v376
      %v406 = vpop.xlane.xlu0 %405
      %407 = vadd.xlane.f32.xlu0 %v377
      %v408 = vpop.xlane.xlu0 %407
      %409 = vadd.xlane.f32.xlu0 %v378
      %v410 = vpop.xlane.xlu0 %409
      %v411 = vmul.f32 %v380, 0.03125
      %v412 = vmul.f32 %v382, 0.03125
      %v413 = vmul.f32 %v384, 0.03125
      %v414 = vmul.f32 %v386, 0.03125
      %v415 = vmul.f32 %v388, 0.03125
      %v416 = vmul.f32 %v390, 0.03125
      %v417 = vmul.f32 %v392, 0.03125
      %v418 = vmul.f32 %v394, 0.03125
      %v419 = vmul.f32 %v396, 0.03125
      %v420 = vmul.f32 %v398, 0.03125
      %v421 = vmul.f32 %v400, 0.03125
      %v422 = vmul.f32 %v402, 0.03125
      %v423 = vmul.f32 %v404, 0.03125
      %v424 = vmul.f32 %v406, 0.03125
      %v425 = vmul.f32 %v408, 0.03125
      %v426 = vmul.f32 %v410, 0.03125
      %v427 = vadd.f32 %v411, 1e-05
      %v428 = vadd.f32 %v412, 1e-05
      %v429 = vadd.f32 %v413, 1e-05
      %v430 = vadd.f32 %v414, 1e-05
      %v431 = vadd.f32 %v415, 1e-05
      %v432 = vadd.f32 %v416, 1e-05
      %v433 = vadd.f32 %v417, 1e-05
      %v434 = vadd.f32 %v418, 1e-05
      %v435 = vadd.f32 %v419, 1e-05
      %v436 = vadd.f32 %v420, 1e-05
      %v437 = vadd.f32 %v421, 1e-05
      %v438 = vadd.f32 %v422, 1e-05
      %v439 = vadd.f32 %v423, 1e-05
      %v440 = vadd.f32 %v424, 1e-05
      %v441 = vadd.f32 %v425, 1e-05
      %v442 = vadd.f32 %v426, 1e-05
      %v443 = vrsqrt.pop %v427
      %v444 = vrsqrt.pop %v428
      %v445 = vrsqrt.pop %v429
      %v446 = vrsqrt.pop %v430
      %v447 = vrsqrt.pop %v431
      %v448 = vrsqrt.pop %v432
      %v449 = vrsqrt.pop %v433
      %v450 = vrsqrt.pop %v434
      %v451 = vrsqrt.pop %v435
      %v452 = vrsqrt.pop %v436
      %v453 = vrsqrt.pop %v437
      %v454 = vrsqrt.pop %v438
      %v455 = vrsqrt.pop %v439
      %v456 = vrsqrt.pop %v440
      %v457 = vrsqrt.pop %v441
      %v458 = vrsqrt.pop %v442
      %v459 = vmul.f32 %v347, %v443
      %v460 = vmul.f32 %v348, %v444
      %v461 = vmul.f32 %v349, %v445
      %v462 = vmul.f32 %v350, %v446
      %v463 = vmul.f32 %v351, %v447
      %v464 = vmul.f32 %v352, %v448
      %v465 = vmul.f32 %v353, %v449
      %v466 = vmul.f32 %v354, %v450
      %v467 = vmul.f32 %v355, %v451
      %v468 = vmul.f32 %v356, %v452
      %v469 = vmul.f32 %v357, %v453
      %v470 = vmul.f32 %v358, %v454
      %v471 = vmul.f32 %v359, %v455
      %v472 = vmul.f32 %v360, %v456
      %v473 = vmul.f32 %v361, %v457
      %v474 = vmul.f32 %v362, %v458
      %v475 = vld [vmem:[%s4 + $0x3] sm:$0x1]
      %v476 = vld [vmem:[%s4 + $0x4] sm:$0x1]
      %v477 = vlaneseq
      %v478 = vshrl.u32 %v477, 7
      %v479 = vsub.s32 0, %v478
      %v480 = vrot.slane %v475, %v479
      %v481 = vmul.f32 %v459, %v480
      %v482 = vmul.f32 %v460, %v480
      %v483 = vmul.f32 %v461, %v480
      %v484 = vmul.f32 %v462, %v480
      %v485 = vmul.f32 %v463, %v480
      %v486 = vmul.f32 %v464, %v480
      %v487 = vmul.f32 %v465, %v480
      %v488 = vmul.f32 %v466, %v480
      %v489 = vmul.f32 %v467, %v480
      %v490 = vmul.f32 %v468, %v480
      %v491 = vmul.f32 %v469, %v480
      %v492 = vmul.f32 %v470, %v480
      %v493 = vmul.f32 %v471, %v480
      %v494 = vmul.f32 %v472, %v480
      %v495 = vmul.f32 %v473, %v480
      %v496 = vmul.f32 %v474, %v480
      %v497 = vlaneseq
      %v498 = vshrl.u32 %v497, 7
      %v499 = vsub.s32 0, %v498
      %v500 = vrot.slane %v476, %v499
      %v501 = vadd.f32 %v481, %v500
      %v502 = vadd.f32 %v482, %v500
      %v503 = vadd.f32 %v483, %v500
      %v504 = vadd.f32 %v484, %v500
      %v505 = vadd.f32 %v485, %v500
      %v506 = vadd.f32 %v486, %v500
      %v507 = vadd.f32 %v487, %v500
      %v508 = vadd.f32 %v488, %v500
      %v509 = vadd.f32 %v489, %v500
      %v510 = vadd.f32 %v490, %v500
      %v511 = vadd.f32 %v491, %v500
      %v512 = vadd.f32 %v492, %v500
      %v513 = vadd.f32 %v493, %v500
      %v514 = vadd.f32 %v494, %v500
      %v515 = vadd.f32 %v495, %v500
      %v516 = vadd.f32 %v496, %v500
      %v517 = vld [vmem:[%s4] sm:$0x1]
      %v518 = vld [vmem:[%s4 + $0x1] sm:$0x1]
      %v519 = vld [vmem:[%s4 + $0x2] sm:$0x1]
      %v520 = vld [vmem:[%s1] sm:$0xff]
      %v521 = vld [vmem:[%s1 + $0x8] sm:$0xff]
      %v522 = vld [vmem:[%s1 + $0x10] sm:$0xff]
      %v523 = vld [vmem:[%s1 + $0x18] sm:$0xff]
      %v524 = vld [vmem:[%s1 + $0x20] sm:$0xff]
      %v525 = vld [vmem:[%s1 + $0x28] sm:$0xff]
      %v526 = vld [vmem:[%s1 + $0x30] sm:$0xff]
      %v527 = vld [vmem:[%s1 + $0x38] sm:$0xff]
      %v528 = vld [vmem:[%s1 + $0x40] sm:$0xff]
      %v529 = vld [vmem:[%s1 + $0x48] sm:$0xff]
      %v530 = vld [vmem:[%s1 + $0x50] sm:$0xff]
      %v531 = vld [vmem:[%s1 + $0x58] sm:$0xff]
      %v532 = vld [vmem:[%s1 + $0x60] sm:$0xff]
      %v533 = vld [vmem:[%s1 + $0x68] sm:$0xff]
      %v534 = vld [vmem:[%s1 + $0x70] sm:$0xff]
      %v535 = vld [vmem:[%s1 + $0x78] sm:$0xff]
      %v536 = vlaneseq
      %v537 = vshrl.u32 %v536, 7
      %v538 = vsub.s32 0, %v537
      %v539 = vrot.slane %v517, %v538
      %540 = vmatprep.subr.mxu0 0.0
      %541 = vmatpush1.msra.mxu0 %v520
      %542 = vmatprep.subr.mxu0 0.0
      %543 = vmatpush1.msra.mxu0 %v521
      %544 = vmatprep.subr.mxu0 0.0
      %545 = vmatpush1.msra.mxu0 %v522
      %546 = vmatprep.subr.mxu0 0.0
      %547 = vmatpush1.msra.mxu0 %v523
      %548 = vmatprep.subr.mxu0 0.0
      %549 = vmatpush1.msra.mxu0 %v524
      %550 = vmatprep.subr.mxu0 0.0
      %551 = vmatpush1.msra.mxu0 %v525
      %552 = vmatprep.subr.mxu0 0.0
      %553 = vmatpush1.msra.mxu0 %v526
      %554 = vmatprep.subr.mxu0 0.0
      %555 = vmatpush1.msra.mxu0 %v527
      %556 = vmatprep.subr.mxu0 0.0
      %557 = vmatpush1.msra.mxu0 %v528
      %558 = vmatprep.subr.mxu0 0.0
      %559 = vmatpush1.msra.mxu0 %v529
      %560 = vmatprep.subr.mxu0 0.0
      %561 = vmatpush1.msra.mxu0 %v530
      %562 = vmatprep.subr.mxu0 0.0
      %563 = vmatpush1.msra.mxu0 %v531
      %564 = vmatprep.subr.mxu0 0.0
      %565 = vmatpush1.msra.mxu0 %v532
      %566 = vmatprep.subr.mxu0 0.0
      %567 = vmatpush1.msra.mxu0 %v533
      %568 = vmatprep.subr.mxu0 0.0
      %569 = vmatpush1.msra.mxu0 %v534
      %570 = vmatprep.subr.mxu0 0.0
      %571 = vmatpush1.msra.mxu0 %v535
      %572 = vmatprep.subr.mxu0 0.0
      %573 = vmatpush1.msra.mxu0 0.0
      %574 = vmatprep.subr.mxu0 0.0
      %575 = vmatpush1.msra.mxu0 0.0
      %576 = vmatprep.subr.mxu0 0.0
      %577 = vmatpush1.msra.mxu0 0.0
      %578 = vmatprep.subr.mxu0 0.0
      %579 = vmatpush1.msra.mxu0 0.0
      %580 = vmatprep.subr.mxu0 0.0
      %581 = vmatpush1.msra.mxu0 0.0
      %582 = vmatprep.subr.mxu0 0.0
      %583 = vmatpush1.msra.mxu0 0.0
      %584 = vmatprep.subr.mxu0 0.0
      %585 = vmatpush1.msra.mxu0 0.0
      %586 = vmatprep.subr.mxu0 0.0
      %587 = vmatpush1.msra.mxu0 0.0
      %588 = vmatprep.subr.mxu0 0.0
      %589 = vmatpush1.msra.mxu0 0.0
      %590 = vmatprep.subr.mxu0 0.0
      %591 = vmatpush1.msra.mxu0 0.0
      %592 = vmatprep.subr.mxu0 0.0
      %593 = vmatpush1.msra.mxu0 0.0
      %594 = vmatprep.subr.mxu0 0.0
      %595 = vmatpush1.msra.mxu0 0.0
      %596 = vmatprep.subr.mxu0 0.0
      %597 = vmatpush1.msra.mxu0 0.0
      %598 = vmatprep.subr.mxu0 0.0
      %599 = vmatpush1.msra.mxu0 0.0
      %600 = vmatprep.subr.mxu0 0.0
      %601 = vmatpush1.msra.mxu0 0.0
      %602 = vmatprep.subr.mxu0 0.0
      %603 = vmatpush1.msra.mxu0 0.0
      %604 = vmatprep.mubr.f32.mxu0 0.0
      %605 = vmatmul.mubr.f32.gmra.mrb[0].mxu0 %v501
      %v606 = vpop.f32.mrb[0].mxu0
      %v607 = vadd.f32 %v539, %v606
      %v608 = vpop.f32.mrb[0].mxu0
      %609 = vmatprep.mubr.f32.mxu0 0.0
      %610 = vmatmul.mubr.f32.gmra.mrb[0].mxu0 %v502
      %v611 = vpop.f32.mrb[0].mxu0
      %v612 = vadd.f32 %v539, %v611
      %v613 = vpop.f32.mrb[0].mxu0
      %614 = vmatprep.mubr.f32.mxu0 0.0
      %615 = vmatmul.mubr.f32.gmra.mrb[0].mxu0 %v503
      %v616 = vpop.f32.mrb[0].mxu0
      %v617 = vadd.f32 %v539, %v616
      %v618 = vpop.f32.mrb[0].mxu0
      %619 = vmatprep.mubr.f32.mxu0 0.0
      %620 = vmatmul.mubr.f32.gmra.mrb[0].mxu0 %v504
      %v621 = vpop.f32.mrb[0].mxu0
      %v622 = vadd.f32 %v539, %v621
      %v623 = vpop.f32.mrb[0].mxu0
      %624 = vmatprep.mubr.f32.mxu0 0.0
      %625 = vmatmul.mubr.f32.gmra.mrb[0].mxu0 %v505
      %v626 = vpop.f32.mrb[0].mxu0
      %v627 = vadd.f32 %v539, %v626
      %v628 = vpop.f32.mrb[0].mxu0
      %629 = vmatprep.mubr.f32.mxu0 0.0
      %630 = vmatmul.mubr.f32.gmra.mrb[0].mxu0 %v506
      %v631 = vpop.f32.mrb[0].mxu0
      %v632 = vadd.f32 %v539, %v631
      %v633 = vpop.f32.mrb[0].mxu0
      %634 = vmatprep.mubr.f32.mxu0 0.0
      %635 = vmatmul.mubr.f32.gmra.mrb[0].mxu0 %v507
      %v636 = vpop.f32.mrb[0].mxu0
      %v637 = vadd.f32 %v539, %v636
      %v638 = vpop.f32.mrb[0].mxu0
      %639 = vmatprep.mubr.f32.mxu0 0.0
      %640 = vmatmul.mubr.f32.gmra.mrb[0].mxu0 %v508
      %v641 = vpop.f32.mrb[0].mxu0
      %v642 = vadd.f32 %v539, %v641
      %v643 = vpop.f32.mrb[0].mxu0
      %644 = vmatprep.mubr.f32.mxu0 0.0
      %645 = vmatmul.mubr.f32.gmra.mrb[0].mxu0 %v509
      %v646 = vpop.f32.mrb[0].mxu0
      %v647 = vadd.f32 %v539, %v646
      %v648 = vpop.f32.mrb[0].mxu0
      %649 = vmatprep.mubr.f32.mxu0 0.0
      %650 = vmatmul.mubr.f32.gmra.mrb[0].mxu0 %v510
      %v651 = vpop.f32.mrb[0].mxu0
      %v652 = vadd.f32 %v539, %v651
      %v653 = vpop.f32.mrb[0].mxu0
      %654 = vmatprep.mubr.f32.mxu0 0.0
      %655 = vmatmul.mubr.f32.gmra.mrb[0].mxu0 %v511
      %v656 = vpop.f32.mrb[0].mxu0
      %v657 = vadd.f32 %v539, %v656
      %v658 = vpop.f32.mrb[0].mxu0
      %659 = vmatprep.mubr.f32.mxu0 0.0
      %660 = vmatmul.mubr.f32.gmra.mrb[0].mxu0 %v512
      %v661 = vpop.f32.mrb[0].mxu0
      %v662 = vadd.f32 %v539, %v661
      %v663 = vpop.f32.mrb[0].mxu0
      %664 = vmatprep.mubr.f32.mxu0 0.0
      %665 = vmatmul.mubr.f32.gmra.mrb[0].mxu0 %v513
      %v666 = vpop.f32.mrb[0].mxu0
      %v667 = vadd.f32 %v539, %v666
      %v668 = vpop.f32.mrb[0].mxu0
      %669 = vmatprep.mubr.f32.mxu0 0.0
      %670 = vmatmul.mubr.f32.gmra.mrb[0].mxu0 %v514
      %v671 = vpop.f32.mrb[0].mxu0
      %v672 = vadd.f32 %v539, %v671
      %v673 = vpop.f32.mrb[0].mxu0
      %674 = vmatprep.mubr.f32.mxu0 0.0
      %675 = vmatmul.mubr.f32.gmra.mrb[0].mxu0 %v515
      %v676 = vpop.f32.mrb[0].mxu0
      %v677 = vadd.f32 %v539, %v676
      %v678 = vpop.f32.mrb[0].mxu0
      %679 = vmatprep.mubr.f32.mxu0 0.0
      %680 = vmatmul.mubr.f32.gmra.mrb[0].mxu0 %v516
      %v681 = vpop.f32.mrb[0].mxu0
      %v682 = vadd.f32 %v539, %v681
      %v683 = vpop.f32.mrb[0].mxu0
      %684 = vdwg.mxu0
      %v685 = vmax.f32 %v607, 0.0
      %v686 = vmax.f32 %v612, 0.0
      %v687 = vmax.f32 %v617, 0.0
      %v688 = vmax.f32 %v622, 0.0
      %v689 = vmax.f32 %v627, 0.0
      %v690 = vmax.f32 %v632, 0.0
      %v691 = vmax.f32 %v637, 0.0
      %v692 = vmax.f32 %v642, 0.0
      %v693 = vmax.f32 %v647, 0.0
      %v694 = vmax.f32 %v652, 0.0
      %v695 = vmax.f32 %v657, 0.0
      %v696 = vmax.f32 %v662, 0.0
      %v697 = vmax.f32 %v667, 0.0
      %v698 = vmax.f32 %v672, 0.0
      %v699 = vmax.f32 %v677, 0.0
      %v700 = vmax.f32 %v682, 0.0
      %v701 = vld [vmem:[%s2] sm:$0xff]
      %v702 = vld [vmem:[%s2 + $0x8] sm:$0xff]
      %v703 = vld [vmem:[%s2 + $0x10] sm:$0xff]
      %v704 = vld [vmem:[%s2 + $0x18] sm:$0xff]
      %v705 = vld [vmem:[%s2 + $0x20] sm:$0xff]
      %v706 = vld [vmem:[%s2 + $0x28] sm:$0xff]
      %v707 = vld [vmem:[%s2 + $0x30] sm:$0xff]
      %v708 = vld [vmem:[%s2 + $0x38] sm:$0xff]
      %v709 = vld [vmem:[%s2 + $0x40] sm:$0xff]
      %v710 = vld [vmem:[%s2 + $0x48] sm:$0xff]
      %v711 = vld [vmem:[%s2 + $0x50] sm:$0xff]
      %v712 = vld [vmem:[%s2 + $0x58] sm:$0xff]
      %v713 = vld [vmem:[%s2 + $0x60] sm:$0xff]
      %v714 = vld [vmem:[%s2 + $0x68] sm:$0xff]
      %v715 = vld [vmem:[%s2 + $0x70] sm:$0xff]
      %v716 = vld [vmem:[%s2 + $0x78] sm:$0xff]
      %v717 = vlaneseq
      %v718 = vshrl.u32 %v717, 7
      %v719 = vsub.s32 0, %v718
      %v720 = vrot.slane %v518, %v719
      %721 = vmatprep.subr.mxu0 0.0
      %722 = vmatpush1.msra.mxu0 %v701
      %723 = vmatprep.subr.mxu0 0.0
      %724 = vmatpush1.msra.mxu0 %v702
      %725 = vmatprep.subr.mxu0 0.0
      %726 = vmatpush1.msra.mxu0 %v703
      %727 = vmatprep.subr.mxu0 0.0
      %728 = vmatpush1.msra.mxu0 %v704
      %729 = vmatprep.subr.mxu0 0.0
      %730 = vmatpush1.msra.mxu0 %v705
      %731 = vmatprep.subr.mxu0 0.0
      %732 = vmatpush1.msra.mxu0 %v706
      %733 = vmatprep.subr.mxu0 0.0
      %734 = vmatpush1.msra.mxu0 %v707
      %735 = vmatprep.subr.mxu0 0.0
      %736 = vmatpush1.msra.mxu0 %v708
      %737 = vmatprep.subr.mxu0 0.0
      %738 = vmatpush1.msra.mxu0 %v709
      %739 = vmatprep.subr.mxu0 0.0
      %740 = vmatpush1.msra.mxu0 %v710
      %741 = vmatprep.subr.mxu0 0.0
      %742 = vmatpush1.msra.mxu0 %v711
      %743 = vmatprep.subr.mxu0 0.0
      %744 = vmatpush1.msra.mxu0 %v712
      %745 = vmatprep.subr.mxu0 0.0
      %746 = vmatpush1.msra.mxu0 %v713
      %747 = vmatprep.subr.mxu0 0.0
      %748 = vmatpush1.msra.mxu0 %v714
      %749 = vmatprep.subr.mxu0 0.0
      %750 = vmatpush1.msra.mxu0 %v715
      %751 = vmatprep.subr.mxu0 0.0
      %752 = vmatpush1.msra.mxu0 %v716
      %753 = vmatprep.subr.mxu0 0.0
      %754 = vmatpush1.msra.mxu0 0.0
      %755 = vmatprep.subr.mxu0 0.0
      %756 = vmatpush1.msra.mxu0 0.0
      %757 = vmatprep.subr.mxu0 0.0
      %758 = vmatpush1.msra.mxu0 0.0
      %759 = vmatprep.subr.mxu0 0.0
      %760 = vmatpush1.msra.mxu0 0.0
      %761 = vmatprep.subr.mxu0 0.0
      %762 = vmatpush1.msra.mxu0 0.0
      %763 = vmatprep.subr.mxu0 0.0
      %764 = vmatpush1.msra.mxu0 0.0
      %765 = vmatprep.subr.mxu0 0.0
      %766 = vmatpush1.msra.mxu0 0.0
      %767 = vmatprep.subr.mxu0 0.0
      %768 = vmatpush1.msra.mxu0 0.0
      %769 = vmatprep.subr.mxu0 0.0
      %770 = vmatpush1.msra.mxu0 0.0
      %771 = vmatprep.subr.mxu0 0.0
      %772 = vmatpush1.msra.mxu0 0.0
      %773 = vmatprep.subr.mxu0 0.0
      %774 = vmatpush1.msra.mxu0 0.0
      %775 = vmatprep.subr.mxu0 0.0
      %776 = vmatpush1.msra.mxu0 0.0
      %777 = vmatprep.subr.mxu0 0.0
      %778 = vmatpush1.msra.mxu0 0.0
      %779 = vmatprep.subr.mxu0 0.0
      %780 = vmatpush1.msra.mxu0 0.0
      %781 = vmatprep.subr.mxu0 0.0
      %782 = vmatpush1.msra.mxu0 0.0
      %783 = vmatprep.subr.mxu0 0.0
      %784 = vmatpush1.msra.mxu0 0.0
      %785 = vmatprep.mubr.f32.mxu0 0.0
      %786 = vmatmul.mubr.f32.gmra.mrb[0].mxu0 %v685
      %v787 = vpop.f32.mrb[0].mxu0
      %v788 = vadd.f32 %v720, %v787
      %v789 = vpop.f32.mrb[0].mxu0
      %790 = vmatprep.mubr.f32.mxu0 0.0
      %791 = vmatmul.mubr.f32.gmra.mrb[0].mxu0 %v686
      %v792 = vpop.f32.mrb[0].mxu0
      %v793 = vadd.f32 %v720, %v792
      %v794 = vpop.f32.mrb[0].mxu0
      %795 = vmatprep.mubr.f32.mxu0 0.0
      %796 = vmatmul.mubr.f32.gmra.mrb[0].mxu0 %v687
      %v797 = vpop.f32.mrb[0].mxu0
      %v798 = vadd.f32 %v720, %v797
      %v799 = vpop.f32.mrb[0].mxu0
      %800 = vmatprep.mubr.f32.mxu0 0.0
      %801 = vmatmul.mubr.f32.gmra.mrb[0].mxu0 %v688
      %v802 = vpop.f32.mrb[0].mxu0
      %v803 = vadd.f32 %v720, %v802
      %v804 = vpop.f32.mrb[0].mxu0
      %805 = vmatprep.mubr.f32.mxu0 0.0
      %806 = vmatmul.mubr.f32.gmra.mrb[0].mxu0 %v689
      %v807 = vpop.f32.mrb[0].mxu0
      %v808 = vadd.f32 %v720, %v807
      %v809 = vpop.f32.mrb[0].mxu0
      %810 = vmatprep.mubr.f32.mxu0 0.0
      %811 = vmatmul.mubr.f32.gmra.mrb[0].mxu0 %v690
      %v812 = vpop.f32.mrb[0].mxu0
      %v813 = vadd.f32 %v720, %v812
      %v814 = vpop.f32.mrb[0].mxu0
      %815 = vmatprep.mubr.f32.mxu0 0.0
      %816 = vmatmul.mubr.f32.gmra.mrb[0].mxu0 %v691
      %v817 = vpop.f32.mrb[0].mxu0
      %v818 = vadd.f32 %v720, %v817
      %v819 = vpop.f32.mrb[0].mxu0
      %820 = vmatprep.mubr.f32.mxu0 0.0
      %821 = vmatmul.mubr.f32.gmra.mrb[0].mxu0 %v692
      %v822 = vpop.f32.mrb[0].mxu0
      %v823 = vadd.f32 %v720, %v822
      %v824 = vpop.f32.mrb[0].mxu0
      %825 = vmatprep.mubr.f32.mxu0 0.0
      %826 = vmatmul.mubr.f32.gmra.mrb[0].mxu0 %v693
      %v827 = vpop.f32.mrb[0].mxu0
      %v828 = vadd.f32 %v720, %v827
      %v829 = vpop.f32.mrb[0].mxu0
      %830 = vmatprep.mubr.f32.mxu0 0.0
      %831 = vmatmul.mubr.f32.gmra.mrb[0].mxu0 %v694
      %v832 = vpop.f32.mrb[0].mxu0
      %v833 = vadd.f32 %v720, %v832
      %v834 = vpop.f32.mrb[0].mxu0
      %835 = vmatprep.mubr.f32.mxu0 0.0
      %836 = vmatmul.mubr.f32.gmra.mrb[0].mxu0 %v695
      %v837 = vpop.f32.mrb[0].mxu0
      %v838 = vadd.f32 %v720, %v837
      %v839 = vpop.f32.mrb[0].mxu0
      %840 = vmatprep.mubr.f32.mxu0 0.0
      %841 = vmatmul.mubr.f32.gmra.mrb[0].mxu0 %v696
      %v842 = vpop.f32.mrb[0].mxu0
      %v843 = vadd.f32 %v720, %v842
      %v844 = vpop.f32.mrb[0].mxu0
      %845 = vmatprep.mubr.f32.mxu0 0.0
      %846 = vmatmul.mubr.f32.gmra.mrb[0].mxu0 %v697
      %v847 = vpop.f32.mrb[0].mxu0
      %v848 = vadd.f32 %v720, %v847
      %v849 = vpop.f32.mrb[0].mxu0
      %850 = vmatprep.mubr.f32.mxu0 0.0
      %851 = vmatmul.mubr.f32.gmra.mrb[0].mxu0 %v698
      %v852 = vpop.f32.mrb[0].mxu0
      %v853 = vadd.f32 %v720, %v852
      %v854 = vpop.f32.mrb[0].mxu0
      %855 = vmatprep.mubr.f32.mxu0 0.0
      %856 = vmatmul.mubr.f32.gmra.mrb[0].mxu0 %v699
      %v857 = vpop.f32.mrb[0].mxu0
      %v858 = vadd.f32 %v720, %v857
      %v859 = vpop.f32.mrb[0].mxu0
      %860 = vmatprep.mubr.f32.mxu0 0.0
      %861 = vmatmul.mubr.f32.gmra.mrb[0].mxu0 %v700
      %v862 = vpop.f32.mrb[0].mxu0
      %v863 = vadd.f32 %v720, %v862
      %v864 = vpop.f32.mrb[0].mxu0
      %865 = vdwg.mxu0
      %v866 = vmax.f32 %v788, 0.0
      %v867 = vmax.f32 %v793, 0.0
      %v868 = vmax.f32 %v798, 0.0
      %v869 = vmax.f32 %v803, 0.0
      %v870 = vmax.f32 %v808, 0.0
      %v871 = vmax.f32 %v813, 0.0
      %v872 = vmax.f32 %v818, 0.0
      %v873 = vmax.f32 %v823, 0.0
      %v874 = vmax.f32 %v828, 0.0
      %v875 = vmax.f32 %v833, 0.0
      %v876 = vmax.f32 %v838, 0.0
      %v877 = vmax.f32 %v843, 0.0
      %v878 = vmax.f32 %v848, 0.0
      %v879 = vmax.f32 %v853, 0.0
      %v880 = vmax.f32 %v858, 0.0
      %v881 = vmax.f32 %v863, 0.0
      %v882 = vld [vmem:[%s3] sm:$0xff]
      %v883 = vld [vmem:[%s3 + $0x8] sm:$0xff]
      %v884 = vld [vmem:[%s3 + $0x10] sm:$0xff]
      %v885 = vld [vmem:[%s3 + $0x18] sm:$0xff]
      %v886 = vld [vmem:[%s3 + $0x20] sm:$0xff]
      %v887 = vld [vmem:[%s3 + $0x28] sm:$0xff]
      %v888 = vld [vmem:[%s3 + $0x30] sm:$0xff]
      %v889 = vld [vmem:[%s3 + $0x38] sm:$0xff]
      %v890 = vld [vmem:[%s3 + $0x40] sm:$0xff]
      %v891 = vld [vmem:[%s3 + $0x48] sm:$0xff]
      %v892 = vld [vmem:[%s3 + $0x50] sm:$0xff]
      %v893 = vld [vmem:[%s3 + $0x58] sm:$0xff]
      %v894 = vld [vmem:[%s3 + $0x60] sm:$0xff]
      %v895 = vld [vmem:[%s3 + $0x68] sm:$0xff]
      %v896 = vld [vmem:[%s3 + $0x70] sm:$0xff]
      %v897 = vld [vmem:[%s3 + $0x78] sm:$0xff]
      %v898 = vlaneseq
      %v899 = vshrl.u32 %v898, 7
      %v900 = vsub.s32 0, %v899
      %v901 = vrot.slane %v519, %v900
      %902 = vmatprep.subr.mxu0 0.0
      %903 = vmatpush1.msra.mxu0 %v882
      %904 = vmatprep.subr.mxu0 0.0
      %905 = vmatpush1.msra.mxu0 %v883
      %906 = vmatprep.subr.mxu0 0.0
      %907 = vmatpush1.msra.mxu0 %v884
      %908 = vmatprep.subr.mxu0 0.0
      %909 = vmatpush1.msra.mxu0 %v885
      %910 = vmatprep.subr.mxu0 0.0
      %911 = vmatpush1.msra.mxu0 %v886
      %912 = vmatprep.subr.mxu0 0.0
      %913 = vmatpush1.msra.mxu0 %v887
      %914 = vmatprep.subr.mxu0 0.0
      %915 = vmatpush1.msra.mxu0 %v888
      %916 = vmatprep.subr.mxu0 0.0
      %917 = vmatpush1.msra.mxu0 %v889
      %918 = vmatprep.subr.mxu0 0.0
      %919 = vmatpush1.msra.mxu0 %v890
      %920 = vmatprep.subr.mxu0 0.0
      %921 = vmatpush1.msra.mxu0 %v891
      %922 = vmatprep.subr.mxu0 0.0
      %923 = vmatpush1.msra.mxu0 %v892
      %924 = vmatprep.subr.mxu0 0.0
      %925 = vmatpush1.msra.mxu0 %v893
      %926 = vmatprep.subr.mxu0 0.0
      %927 = vmatpush1.msra.mxu0 %v894
      %928 = vmatprep.subr.mxu0 0.0
      %929 = vmatpush1.msra.mxu0 %v895
      %930 = vmatprep.subr.mxu0 0.0
      %931 = vmatpush1.msra.mxu0 %v896
      %932 = vmatprep.subr.mxu0 0.0
      %933 = vmatpush1.msra.mxu0 %v897
      %934 = vmatprep.subr.mxu0 0.0
      %935 = vmatpush1.msra.mxu0 0.0
      %936 = vmatprep.subr.mxu0 0.0
      %937 = vmatpush1.msra.mxu0 0.0
      %938 = vmatprep.subr.mxu0 0.0
      %939 = vmatpush1.msra.mxu0 0.0
      %940 = vmatprep.subr.mxu0 0.0
      %941 = vmatpush1.msra.mxu0 0.0
      %942 = vmatprep.subr.mxu0 0.0
      %943 = vmatpush1.msra.mxu0 0.0
      %944 = vmatprep.subr.mxu0 0.0
      %945 = vmatpush1.msra.mxu0 0.0
      %946 = vmatprep.subr.mxu0 0.0
      %947 = vmatpush1.msra.mxu0 0.0
      %948 = vmatprep.subr.mxu0 0.0
      %949 = vmatpush1.msra.mxu0 0.0
      %950 = vmatprep.subr.mxu0 0.0
      %951 = vmatpush1.msra.mxu0 0.0
      %952 = vmatprep.subr.mxu0 0.0
      %953 = vmatpush1.msra.mxu0 0.0
      %954 = vmatprep.subr.mxu0 0.0
      %955 = vmatpush1.msra.mxu0 0.0
      %956 = vmatprep.subr.mxu0 0.0
      %957 = vmatpush1.msra.mxu0 0.0
      %958 = vmatprep.subr.mxu0 0.0
      %959 = vmatpush1.msra.mxu0 0.0
      %960 = vmatprep.subr.mxu0 0.0
      %961 = vmatpush1.msra.mxu0 0.0
      %962 = vmatprep.subr.mxu0 0.0
      %963 = vmatpush1.msra.mxu0 0.0
      %964 = vmatprep.subr.mxu0 0.0
      %965 = vmatpush1.msra.mxu0 0.0
      %966 = vmatprep.mubr.f32.mxu0 0.0
      %967 = vmatmul.mubr.f32.gmra.mrb[0].mxu0 %v866
      %v968 = vpop.f32.mrb[0].mxu0
      %v969 = vadd.f32 %v901, %v968
      %v970 = vpop.f32.mrb[0].mxu0
      %971 = vmatprep.mubr.f32.mxu0 0.0
      %972 = vmatmul.mubr.f32.gmra.mrb[0].mxu0 %v867
      %v973 = vpop.f32.mrb[0].mxu0
      %v974 = vadd.f32 %v901, %v973
      %v975 = vpop.f32.mrb[0].mxu0
      %976 = vmatprep.mubr.f32.mxu0 0.0
      %977 = vmatmul.mubr.f32.gmra.mrb[0].mxu0 %v868
      %v978 = vpop.f32.mrb[0].mxu0
      %v979 = vadd.f32 %v901, %v978
      %v980 = vpop.f32.mrb[0].mxu0
      %981 = vmatprep.mubr.f32.mxu0 0.0
      %982 = vmatmul.mubr.f32.gmra.mrb[0].mxu0 %v869
      %v983 = vpop.f32.mrb[0].mxu0
      %v984 = vadd.f32 %v901, %v983
      %v985 = vpop.f32.mrb[0].mxu0
      %986 = vmatprep.mubr.f32.mxu0 0.0
      %987 = vmatmul.mubr.f32.gmra.mrb[0].mxu0 %v870
      %v988 = vpop.f32.mrb[0].mxu0
      %v989 = vadd.f32 %v901, %v988
      %v990 = vpop.f32.mrb[0].mxu0
      %991 = vmatprep.mubr.f32.mxu0 0.0
      %992 = vmatmul.mubr.f32.gmra.mrb[0].mxu0 %v871
      %v993 = vpop.f32.mrb[0].mxu0
      %v994 = vadd.f32 %v901, %v993
      %v995 = vpop.f32.mrb[0].mxu0
      %996 = vmatprep.mubr.f32.mxu0 0.0
      %997 = vmatmul.mubr.f32.gmra.mrb[0].mxu0 %v872
      %v998 = vpop.f32.mrb[0].mxu0
      %v999 = vadd.f32 %v901, %v998
      %v1000 = vpop.f32.mrb[0].mxu0
      %1001 = vmatprep.mubr.f32.mxu0 0.0
      %1002 = vmatmul.mubr.f32.gmra.mrb[0].mxu0 %v873
      %v1003 = vpop.f32.mrb[0].mxu0
      %v1004 = vadd.f32 %v901, %v1003
      %v1005 = vpop.f32.mrb[0].mxu0
      %1006 = vmatprep.mubr.f32.mxu0 0.0
      %1007 = vmatmul.mubr.f32.gmra.mrb[0].mxu0 %v874
      %v1008 = vpop.f32.mrb[0].mxu0
      %v1009 = vadd.f32 %v901, %v1008
      %v1010 = vpop.f32.mrb[0].mxu0
      %1011 = vmatprep.mubr.f32.mxu0 0.0
      %1012 = vmatmul.mubr.f32.gmra.mrb[0].mxu0 %v875
      %v1013 = vpop.f32.mrb[0].mxu0
      %v1014 = vadd.f32 %v901, %v1013
      %v1015 = vpop.f32.mrb[0].mxu0
      %1016 = vmatprep.mubr.f32.mxu0 0.0
      %1017 = vmatmul.mubr.f32.gmra.mrb[0].mxu0 %v876
      %v1018 = vpop.f32.mrb[0].mxu0
      %v1019 = vadd.f32 %v901, %v1018
      %v1020 = vpop.f32.mrb[0].mxu0
      %1021 = vmatprep.mubr.f32.mxu0 0.0
      %1022 = vmatmul.mubr.f32.gmra.mrb[0].mxu0 %v877
      %v1023 = vpop.f32.mrb[0].mxu0
      %v1024 = vadd.f32 %v901, %v1023
      %v1025 = vpop.f32.mrb[0].mxu0
      %1026 = vmatprep.mubr.f32.mxu0 0.0
      %1027 = vmatmul.mubr.f32.gmra.mrb[0].mxu0 %v878
      %v1028 = vpop.f32.mrb[0].mxu0
      %v1029 = vadd.f32 %v901, %v1028
      %v1030 = vpop.f32.mrb[0].mxu0
      %1031 = vmatprep.mubr.f32.mxu0 0.0
      %1032 = vmatmul.mubr.f32.gmra.mrb[0].mxu0 %v879
      %v1033 = vpop.f32.mrb[0].mxu0
      %v1034 = vadd.f32 %v901, %v1033
      %v1035 = vpop.f32.mrb[0].mxu0
      %1036 = vmatprep.mubr.f32.mxu0 0.0
      %1037 = vmatmul.mubr.f32.gmra.mrb[0].mxu0 %v880
      %v1038 = vpop.f32.mrb[0].mxu0
      %v1039 = vadd.f32 %v901, %v1038
      %v1040 = vpop.f32.mrb[0].mxu0
      %1041 = vmatprep.mubr.f32.mxu0 0.0
      %1042 = vmatmul.mubr.f32.gmra.mrb[0].mxu0 %v881
      %v1043 = vpop.f32.mrb[0].mxu0
      %v1044 = vadd.f32 %v901, %v1043
      %v1045 = vpop.f32.mrb[0].mxu0
      %1046 = vdwg.mxu0
      %1047 = vst [vmem:[%s259] sm:$0xff] %v969
      %1048 = vst [vmem:[%s259 + $0x8] sm:$0xff] %v974
      %1049 = vst [vmem:[%s259 + $0x10] sm:$0xff] %v979
      %1050 = vst [vmem:[%s259 + $0x18] sm:$0xff] %v984
      %1051 = vst [vmem:[%s259 + $0x20] sm:$0xff] %v989
      %1052 = vst [vmem:[%s259 + $0x28] sm:$0xff] %v994
      %1053 = vst [vmem:[%s259 + $0x30] sm:$0xff] %v999
      %1054 = vst [vmem:[%s259 + $0x38] sm:$0xff] %v1004
      %1055 = vst [vmem:[%s259 + $0x40] sm:$0xff] %v1009
      %1056 = vst [vmem:[%s259 + $0x48] sm:$0xff] %v1014
      %1057 = vst [vmem:[%s259 + $0x50] sm:$0xff] %v1019
      %1058 = vst [vmem:[%s259 + $0x58] sm:$0xff] %v1024
      %1059 = vst [vmem:[%s259 + $0x60] sm:$0xff] %v1029
      %1060 = vst [vmem:[%s259 + $0x68] sm:$0xff] %v1034
      %1061 = vst [vmem:[%s259 + $0x70] sm:$0xff] %v1039
      %1062 = vst [vmem:[%s259 + $0x78] sm:$0xff] %v1044
      %s1063 = smul.u32 %s18, 128
      %v1064 = vlaneseq
      %v1065 = vshrl.u32 %v1064, 7
      %v1066 = vadd.s32 %v1065, 8
      %v1067 = vadd.s32 %v1065, 16
      %v1068 = vadd.s32 %v1065, 24
      %v1069 = vadd.s32 %v1065, 32
      %v1070 = vadd.s32 %v1065, 40
      %v1071 = vadd.s32 %v1065, 48
      %v1072 = vadd.s32 %v1065, 56
      %v1073 = vadd.s32 %v1065, 64
      %v1074 = vadd.s32 %v1065, 72
      %v1075 = vadd.s32 %v1065, 80
      %v1076 = vadd.s32 %v1065, 88
      %v1077 = vadd.s32 %v1065, 96
      %v1078 = vadd.s32 %v1065, 104
      %v1079 = vadd.s32 %v1065, 112
      %v1080 = vadd.s32 %v1065, 120
      %v1081 = vstv %s1063
      %v1082 = vadd.s32 %v1081, %v1065
      %v1083 = vadd.s32 %v1081, %v1066
      %v1084 = vadd.s32 %v1081, %v1067
      %v1085 = vadd.s32 %v1081, %v1068
      %v1086 = vadd.s32 %v1081, %v1069
      %v1087 = vadd.s32 %v1081, %v1070
      %v1088 = vadd.s32 %v1081, %v1071
      %v1089 = vadd.s32 %v1081, %v1072
      %v1090 = vadd.s32 %v1081, %v1073
      %v1091 = vadd.s32 %v1081, %v1074
      %v1092 = vadd.s32 %v1081, %v1075
      %v1093 = vadd.s32 %v1081, %v1076
      %v1094 = vadd.s32 %v1081, %v1077
      %v1095 = vadd.s32 %v1081, %v1078
      %v1096 = vadd.s32 %v1081, %v1079
      %v1097 = vadd.s32 %v1081, %v1080
      %vm1098 = vcmp.lt.s32.totalorder %v1082, 300
      %vm1099 = vcmp.lt.s32.totalorder %v1083, 300
      %vm1100 = vcmp.lt.s32.totalorder %v1084, 300
      %vm1101 = vcmp.lt.s32.totalorder %v1085, 300
      %vm1102 = vcmp.lt.s32.totalorder %v1086, 300
      %vm1103 = vcmp.lt.s32.totalorder %v1087, 300
      %vm1104 = vcmp.lt.s32.totalorder %v1088, 300
      %vm1105 = vcmp.lt.s32.totalorder %v1089, 300
      %vm1106 = vcmp.lt.s32.totalorder %v1090, 300
      %vm1107 = vcmp.lt.s32.totalorder %v1091, 300
      %vm1108 = vcmp.lt.s32.totalorder %v1092, 300
      %vm1109 = vcmp.lt.s32.totalorder %v1093, 300
      %vm1110 = vcmp.lt.s32.totalorder %v1094, 300
      %vm1111 = vcmp.lt.s32.totalorder %v1095, 300
      %vm1112 = vcmp.lt.s32.totalorder %v1096, 300
      %vm1113 = vcmp.lt.s32.totalorder %v1097, 300
      %v1114 = vmul.f32 %v969, %v969
      %v1115 = vmul.f32 %v974, %v974
      %v1116 = vmul.f32 %v979, %v979
      %v1117 = vmul.f32 %v984, %v984
      %v1118 = vmul.f32 %v989, %v989
      %v1119 = vmul.f32 %v994, %v994
      %v1120 = vmul.f32 %v999, %v999
      %v1121 = vmul.f32 %v1004, %v1004
      %v1122 = vmul.f32 %v1009, %v1009
      %v1123 = vmul.f32 %v1014, %v1014
      %v1124 = vmul.f32 %v1019, %v1019
      %v1125 = vmul.f32 %v1024, %v1024
      %v1126 = vmul.f32 %v1029, %v1029
      %v1127 = vmul.f32 %v1034, %v1034
      %v1128 = vmul.f32 %v1039, %v1039
      %v1129 = vmul.f32 %v1044, %v1044
      %v1130 = vsel %vm1098, 1, 0
      %v1131 = vsel %vm1099, 1, 0
      %v1132 = vsel %vm1100, 1, 0
      %v1133 = vsel %vm1101, 1, 0
      %v1134 = vsel %vm1102, 1, 0
      %v1135 = vsel %vm1103, 1, 0
      %v1136 = vsel %vm1104, 1, 0
      %v1137 = vsel %vm1105, 1, 0
      %v1138 = vsel %vm1106, 1, 0
      %v1139 = vsel %vm1107, 1, 0
      %v1140 = vsel %vm1108, 1, 0
      %v1141 = vsel %vm1109, 1, 0
      %v1142 = vsel %vm1110, 1, 0
      %v1143 = vsel %vm1111, 1, 0
      %v1144 = vsel %vm1112, 1, 0
      %v1145 = vsel %vm1113, 1, 0
      %vm1146 = vcmp.eq.s32.totalorder %v1130, 1
      %vm1147 = vcmp.eq.s32.totalorder %v1131, 1
      %vm1148 = vcmp.eq.s32.totalorder %v1132, 1
      %vm1149 = vcmp.eq.s32.totalorder %v1133, 1
      %vm1150 = vcmp.eq.s32.totalorder %v1134, 1
      %vm1151 = vcmp.eq.s32.totalorder %v1135, 1
      %vm1152 = vcmp.eq.s32.totalorder %v1136, 1
      %vm1153 = vcmp.eq.s32.totalorder %v1137, 1
      %vm1154 = vcmp.eq.s32.totalorder %v1138, 1
      %vm1155 = vcmp.eq.s32.totalorder %v1139, 1
      %vm1156 = vcmp.eq.s32.totalorder %v1140, 1
      %vm1157 = vcmp.eq.s32.totalorder %v1141, 1
      %vm1158 = vcmp.eq.s32.totalorder %v1142, 1
      %vm1159 = vcmp.eq.s32.totalorder %v1143, 1
      %vm1160 = vcmp.eq.s32.totalorder %v1144, 1
      %vm1161 = vcmp.eq.s32.totalorder %v1145, 1
      %v1162 = vsel %vm1146, %v1114, 0.0
      %v1163 = vsel %vm1147, %v1115, 0.0
      %v1164 = vsel %vm1148, %v1116, 0.0
      %v1165 = vsel %vm1149, %v1117, 0.0
      %v1166 = vsel %vm1150, %v1118, 0.0
      %v1167 = vsel %vm1151, %v1119, 0.0
      %v1168 = vsel %vm1152, %v1120, 0.0
      %v1169 = vsel %vm1153, %v1121, 0.0
      %v1170 = vsel %vm1154, %v1122, 0.0
      %v1171 = vsel %vm1155, %v1123, 0.0
      %v1172 = vsel %vm1156, %v1124, 0.0
      %v1173 = vsel %vm1157, %v1125, 0.0
      %v1174 = vsel %vm1158, %v1126, 0.0
      %v1175 = vsel %vm1159, %v1127, 0.0
      %v1176 = vsel %vm1160, %v1128, 0.0
      %v1177 = vsel %vm1161, %v1129, 0.0
      %v1178 = vadd.f32 %v1162, %v1163
      %v1179 = vadd.f32 %v1178, %v1164
      %v1180 = vadd.f32 %v1179, %v1165
      %v1181 = vadd.f32 %v1180, %v1166
      %v1182 = vadd.f32 %v1181, %v1167
      %v1183 = vadd.f32 %v1182, %v1168
      %v1184 = vadd.f32 %v1183, %v1169
      %v1185 = vadd.f32 %v1184, %v1170
      %v1186 = vadd.f32 %v1185, %v1171
      %v1187 = vadd.f32 %v1186, %v1172
      %v1188 = vadd.f32 %v1187, %v1173
      %v1189 = vadd.f32 %v1188, %v1174
      %v1190 = vadd.f32 %v1189, %v1175
      %v1191 = vadd.f32 %v1190, %v1176
      %v1192 = vadd.f32 %v1191, %v1177
      %1193 = vadd.xlane.f32.xlu0 %v1192
      %v1194 = vpop.xlane.xlu0 %1193
      %v1195 = vrot.slane %v1194, 4
      %v1196 = vadd.f32 %v1194, %v1195
      %v1197 = vrot.slane %v1196, 2
      %v1198 = vadd.f32 %v1196, %v1197
      %v1199 = vrot.slane %v1198, 1
      %v1200 = vadd.f32 %v1198, %v1199
      %s1201 = vtos %v1200
      %v1202 = vstv %s1201
      %1203 = vst [vmem:[%s263] sm:$0x1] %v1202
      %s1204 = smul.u32 16, %s18
      %p1205 = scmp.lt.s32.totalorder %s1204, 47
      %s1206 = scalar_select %p1205, %s1204, 47
      %s1207 = smul.addr %s1206, 8
      %s1208 = scalar_lea.vmem %s5, %s1207
      %p1209 = scmp.lt.s32.totalorder %s18, 2
      %s1210 = scalar_select %p1209, %s18, 2
      %s1211 = scalar_lea.vmem %s6, %s1210
      // Predicated region
      $region41: #{fwd.1} parent=39 // pred_check
        %p1212 = pneg %p146
      $region42: #{fwd.1} parent=39 // pred_check_branch
        %1214 = sbr.rel (%p1212) target = $region44
      $region43: #{fwd.1} parent=39 // pred_region
        %s1215 = smul.u32 16, %s18
      $region44: #{fwd.1} parent=39 // pred_fallthru
        _
      // Predicated region
      $region45: #{fwd.1} parent=39 // pred_check
        %p1216 = pneg %p172
      $region46: #{fwd.1} parent=39 // pred_check_branch
        %1218 = sbr.rel (%p1216) target = $region48
      $region47: #{fwd.1} parent=39 // pred_region
        _
      $region48: #{fwd.1} parent=39 // pred_fallthru
        _
    $region40: #{fwd.1} parent=5 // pred_fallthru
      _
    %p1219 = scmp.le.s32.totalorder 2, %s13
    // Predicated region
    $region49: #{fwd.1} parent=5 // pred_check
      %p1220 = pneg %p1219
    $region50: #{fwd.1} parent=5 // pred_check_branch
      %1222 = sbr.rel (%p1220) target = $region52
    $region51: #{fwd.1} parent=5 // pred_region
      %s1223 = ssub.s32 %s13, 2
      // Predicated region
      $region53: #{fwd.1} parent=51 // pred_check
        %p1224 = pneg %p152
      $region54: #{fwd.1} parent=51 // pred_check_branch
        %1226 = sbr.rel (%p1224) target = $region56
      $region55: #{fwd.1} parent=51 // pred_region
        %s1227 = smul.u32 16, %s19
        %p1228 = scmp.lt.s32.totalorder %s1227, 47
        %s1229 = scalar_select %p1228, %s1227, 47
        %s1230 = smul.addr %s1229, 8
        %s1231 = scalar_lea.vmem %s5, %s1230
      $region56: #{fwd.1} parent=51 // pred_fallthru
        _
      // Predicated region
      $region57: #{fwd.1} parent=51 // pred_check
        %p1232 = pneg %p178
      $region58: #{fwd.1} parent=51 // pred_check_branch
        %1234 = sbr.rel (%p1232) target = $region60
      $region59: #{fwd.1} parent=51 // pred_region
        %p1235 = scmp.lt.s32.totalorder %s19, 2
        %s1236 = scalar_select %p1235, %s19, 2
        %s1237 = scalar_lea.vmem %s6, %s1236
      $region60: #{fwd.1} parent=51 // pred_fallthru
        _
    $region52: #{fwd.1} parent=5 // pred_fallthru
      _
  $region6: #{fwd.1} parent=0 // loop_footer
    %s17 = sadd.s32 1, %s13
  $region7: #{fwd.1} parent=0 // loop_footer_branch
    %12 = sbr.rel target = $region3
  $region8: #{fwd.1} parent=0 // loop_exit
    _

</llo_original>
